<compile_context>
chip_gen: v6e
topology: v6e:2x2x1
jax: 0.10.0
libtpu: 0.0.40
codegen_flags: <defaults>
</compile_context>

<pallas_src>
import functools

import jax
import jax.numpy as jnp
from jax.experimental import pallas as pl
from jax.experimental.pallas import tpu as pltpu

ACT_DTYPE = jnp.bfloat16                 # activations / GEMM operands


def _round_up(x, m):
    return (x + m - 1) // m * m


def _detect_vmem_bytes():
    try:
        info = pltpu.get_tpu_info()
        cap = getattr(info, "vmem_capacity_bytes", None)
        if cap:
            return int(cap)
    except Exception:
        pass
    return 64 * 1024 * 1024              # conservative (v7x-sized) fallback


_VMEM_CAP = _detect_vmem_bytes()
_BIG_VMEM = _VMEM_CAP >= 100 * 1024 * 1024          # v5e / v6e: 128 MiB VMEM
VMEM_LIMIT_BYTES = (100 if _BIG_VMEM else 48) * 1024 * 1024
TM_MAX = 2048 if _BIG_VMEM else 1024     # GEMM rows per tile
TN_MAX = 256                             # output channels per tile
TK_MAX = 2048 if _BIG_VMEM else 512      # contraction elements per K step


def _pick_n_tile(n):
    if n <= TN_MAX:
        return n
    for t in (256, 128):
        if n % t == 0:
            return t
    return None


def _pick_k_tile(k):
    if k <= TK_MAX:
        return k
    for t in (512, 384, 256, 128):
        if k % t == 0:
            return t
    return None


# -----------------------------------------------------------------------------
# Fused GEMM kernels: y = act((x @ w) * scale + bias [+ residual])
# -----------------------------------------------------------------------------
def _gemm_bn_act_single_kernel(x_ref, w_ref, s_ref, b_ref, *rest, activation,
                               has_residual):
    """Single K step: dot -> epilogue -> store, no scratch accumulator."""
    if has_residual:
        r_ref, o_ref = rest
    else:
        (o_ref,) = rest
    y = jnp.dot(x_ref[...], w_ref[...], preferred_element_type=jnp.float32)
    y = y * s_ref[...] + b_ref[...]
    if has_residual:
        y = y + r_ref[...].astype(jnp.float32)
    if activation == "relu":
        y = jnp.maximum(y, 0.0)
    o_ref[...] = y.astype(o_ref.dtype)


def _gemm_bn_act_kernel(x_ref, w_ref, s_ref, b_ref, *rest, activation,
                        has_residual):
    """Multi K step: f32 VMEM accumulator, first tile written (no memset)."""
    if has_residual:
        r_ref, o_ref, acc_ref = rest
    else:
        o_ref, acc_ref = rest
    k = pl.program_id(2)

    t = jnp.dot(x_ref[...], w_ref[...], preferred_element_type=jnp.float32)

    @pl.when(k == 0)
    def _():
        acc_ref[...] = t

    @pl.when(k != 0)
    def _():
        acc_ref[...] += t

    @pl.when(k == pl.num_programs(2) - 1)
    def _():
        y = acc_ref[...] * s_ref[...] + b_ref[...]
        if has_residual:
            y = y + r_ref[...].astype(jnp.float32)
        if activation == "relu":
            y = jnp.maximum(y, 0.0)
        o_ref[...] = y.astype(o_ref.dtype)


def matmul_bn_act(x, w, scale, bias, activation="none", residual=None,
                  out_dtype=ACT_DTYPE, tk=None):
    """x: (M, K), w: (K, N), scale/bias: (N,), residual: (M, N) or None."""
    M, K = x.shape
    K2, N = w.shape
    assert K == K2

    x = x.astype(jnp.bfloat16)
    w = w.astype(jnp.bfloat16)
    scale = scale.astype(jnp.float32)
    bias = bias.astype(jnp.float32)

    # --- N tiling (all ResNet50 widths divide cleanly; pad only as fallback).
    tn = _pick_n_tile(N)
    Np = N
    if tn is None:
        Np = _round_up(N, 128)
        tn = 128
        w = jnp.pad(w, ((0, 0), (0, Np - N)))
        scale = jnp.pad(scale, (0, Np - N))
        bias = jnp.pad(bias, (0, Np - N))
        if residual is not None:
            residual = jnp.pad(residual, ((0, 0), (0, Np - N)))

    # --- K tiling chosen so K % tk == 0 -> no whole-tensor pad of x/w.
    if tk is None:
        tk = _pick_k_tile(K)
    Kp = K
    if tk is None:
        Kp = _round_up(K, 128)
        tk = 128
        x = jnp.pad(x, ((0, 0), (0, Kp - K)))
        w = jnp.pad(w, ((0, Kp - K), (0, 0)))
    nk = Kp // tk

    # --- M tiling: ragged last tile handled by BlockSpec masking (no pad).
    tm = M if M <= TM_MAX else TM_MAX
    if Np // tn == 1 and 256 < M <= TM_MAX:
        # Guarantee >=2 blocks on a parallel axis so both v7x cores get work.
        tm = _round_up((M + 1) // 2, 8)

    s2 = scale.reshape(1, Np)
    b2 = bias.reshape(1, Np)
    has_residual = residual is not None

    if nk == 1:
        grid = (pl.cdiv(M, tm), Np // tn)
        in_specs = [
            pl.BlockSpec((tm, Kp), lambda i, j: (i, 0)),
            pl.BlockSpec((Kp, tn), lambda i, j: (0, j)),
            pl.BlockSpec((1, tn), lambda i, j: (0, j)),
            pl.BlockSpec((1, tn), lambda i, j: (0, j)),
        ]
        operands = [x, w, s2, b2]
        if has_residual:
            in_specs.append(pl.BlockSpec((tm, tn), lambda i, j: (i, j)))
            operands.append(residual.astype(jnp.bfloat16))
        out = pl.pallas_call(
            functools.partial(_gemm_bn_act_single_kernel,
                              activation=activation,
                              has_residual=has_residual),
            out_shape=jax.ShapeDtypeStruct((M, Np), out_dtype),
            grid_spec=pltpu.PrefetchScalarGridSpec(
                num_scalar_prefetch=0,
                grid=grid,
                in_specs=in_specs,
                out_specs=pl.BlockSpec((tm, tn), lambda i, j: (i, j)),
            ),
            compiler_params=pltpu.CompilerParams(
                dimension_semantics=("parallel", "parallel"),
                vmem_limit_bytes=VMEM_LIMIT_BYTES,
            ),
        )(*operands)
    else:
        grid = (pl.cdiv(M, tm), Np // tn, nk)
        in_specs = [
            pl.BlockSpec((tm, tk), lambda i, j, k: (i, k)),
            pl.BlockSpec((tk, tn), lambda i, j, k: (k, j)),
            pl.BlockSpec((1, tn), lambda i, j, k: (0, j)),
            pl.BlockSpec((1, tn), lambda i, j, k: (0, j)),
        ]
        operands = [x, w, s2, b2]
        if has_residual:
            in_specs.append(pl.BlockSpec((tm, tn), lambda i, j, k: (i, j)))
            operands.append(residual.astype(jnp.bfloat16))
        out = pl.pallas_call(
            functools.partial(_gemm_bn_act_kernel, activation=activation,
                              has_residual=has_residual),
            out_shape=jax.ShapeDtypeStruct((M, Np), out_dtype),
            grid_spec=pltpu.PrefetchScalarGridSpec(
                num_scalar_prefetch=0,
                grid=grid,
                in_specs=in_specs,
                out_specs=pl.BlockSpec((tm, tn), lambda i, j, k: (i, j)),
                scratch_shapes=[pltpu.VMEM((tm, tn), jnp.float32)],
            ),
            compiler_params=pltpu.CompilerParams(
                dimension_semantics=("parallel", "parallel", "arbitrary"),
                vmem_limit_bytes=VMEM_LIMIT_BYTES,
            ),
        )(*operands)

    if Np != N:
        out = out[:, :N]
    return out


# -----------------------------------------------------------------------------
# Direct stride-1 3x3 conv: flattened halo buffer + double-buffered DMA,
# 9 windowed-tap matmuls over the full (8-aligned) padded width, fused BN+ReLU.
# -----------------------------------------------------------------------------
def _conv3x3_direct_kernel(x_hbm, w_ref, s_ref, b_ref, o_ref, xbuf, sem,
                           *, th, wo, wpad, hp):
    n = pl.program_id(0)
    hi = pl.program_id(1)
    c = pl.program_id(2)
    nh = pl.num_programs(1)
    rows = (th + 2) * wpad
    slot = hi % 2

    def halo_copy(h_idx, slot_idx):
        start_row = (n * hp + h_idx * th) * wpad
        return pltpu.make_async_copy(
            x_hbm.at[pl.ds(start_row, rows)],
            xbuf.at[slot_idx, pl.ds(0, rows)],
            sem.at[slot_idx])

    # Prime the pipeline at the first row-block of each image.
    @pl.when(jnp.logical_and(c == 0, hi == 0))
    def _():
        halo_copy(0, 0).start()

    # Halo is fetched once per (n, hi); repeated Cout tiles (c > 0) reuse it.
    @pl.when(c == 0)
    def _():
        halo_copy(hi, slot).wait()

        @pl.when(hi + 1 < nh)
        def _():
            halo_copy(hi + 1, 1 - slot).start()   # prefetch next row-block

    # 9 taps: each is a plain 2-D windowed load from the flattened halo buffer
    # (no slice+reshape relayouts); accumulate in a value (no scratch).
    slab = xbuf.at[slot]
    L = th * wpad
    acc = None
    for dy in range(3):
        for dx in range(3):
            win = slab[pl.ds(dy * wpad + dx, L), :]
            t = jnp.dot(win, w_ref[dy * 3 + dx],
                        preferred_element_type=jnp.float32)
            acc = t if acc is None else acc + t

    y = jnp.maximum(acc * s_ref[...] + b_ref[...], 0.0)
    y = y.reshape(th, wpad, -1)[:, :wo, :]          # drop padded halo columns
    o_ref[...] = y.reshape(o_ref.shape).astype(o_ref.dtype)


def conv3x3_bn_relu_direct(x, p):
    """3x3, stride 1, pad 1 conv + folded BN + ReLU without HBM im2col."""
    N, H, W, Cin = x.shape
    Cout = p["w"].shape[-1]
    Ho, Wo = H, W
    Hp = H + 2
    Wpad = _round_up(W + 2, 8)          # sublane-aligned padded width

    x = x.astype(jnp.bfloat16)
    # TODO(synk): DMA interior rows straight from the unpadded activation and
    # zero/mask the 1-pixel halo in-kernel to remove this extra HBM copy.
    xflat = jnp.pad(x, ((0, 0), (1, 1), (1, Wpad - W - 1), (0, 0))).reshape(
        N * Hp * Wpad, Cin)

    # Output-row tile: largest divisor of Ho giving <= ~1024 GEMM rows/step.
    th_max = max(1, 1024 // Wpad)
    th = 1
    for t in range(min(Ho, th_max), 0, -1):
        if Ho % t == 0:
            th = t
            break

    tn = _pick_n_tile(Cout)
    w3 = p["w"].astype(jnp.bfloat16).reshape(9, Cin, Cout)
    s2 = p["scale"].astype(jnp.float32).reshape(1, Cout)
    b2 = p["bias"].astype(jnp.float32).reshape(1, Cout)

    rows = (th + 2) * Wpad
    grid = (N, Ho // th, Cout // tn)

    out = pl.pallas_call(
        functools.partial(_conv3x3_direct_kernel, th=th, wo=Wo, wpad=Wpad,
                          hp=Hp),
        out_shape=jax.ShapeDtypeStruct((N, Ho // th, th * Wo, Cout), ACT_DTYPE),
        grid_spec=pltpu.PrefetchScalarGridSpec(
            num_scalar_prefetch=0,
            grid=grid,
            in_specs=[
                pl.BlockSpec(memory_space=pl.ANY),                      # x HBM
                pl.BlockSpec((9, Cin, tn), lambda n, h, c: (0, 0, c)),  # weights
                pl.BlockSpec((1, tn), lambda n, h, c: (0, c)),          # scale
                pl.BlockSpec((1, tn), lambda n, h, c: (0, c)),          # bias
            ],
            out_specs=pl.BlockSpec((1, 1, th * Wo, tn),
                                   lambda n, h, c: (n, h, 0, c)),
            scratch_shapes=[
                # 2 halo slots (+8 spare rows so shifted tap windows stay
                # inside the allocation; spare rows only feed discarded cols).
                pltpu.VMEM((2, rows + 8, Cin), jnp.bfloat16),
                pltpu.SemaphoreType.DMA((2,)),
            ],
        ),
        compiler_params=pltpu.CompilerParams(
            # hi / c are "arbitrary": the double-buffered DMA couples
            # consecutive row-blocks of one image; images stay parallel.
            dimension_semantics=("parallel", "arbitrary", "arbitrary"),
            vmem_limit_bytes=VMEM_LIMIT_BYTES,
        ),
    )(xflat, w3, s2, b2)
    return out.reshape(N, Ho, Wo, Cout)


# -----------------------------------------------------------------------------
# Max pool 3x3 / stride 2 / pad 1 and global average pool
# -----------------------------------------------------------------------------
def _maxpool_rows_kernel(cm_ref, o_ref, *, ho):
    # Whole column-maxed image is resident in VMEM; all three row taps are
    # VMEM reads (one grid step per image, no re-read of overlapping rows).
    for h in range(ho):
        r = jnp.maximum(jnp.maximum(cm_ref[0, 2 * h], cm_ref[0, 2 * h + 1]),
                        cm_ref[0, 2 * h + 2])
        o_ref[0, h] = r


def maxpool_3x3_s2_p1(x):
    N, H, W, C = x.shape
    x = x.astype(ACT_DTYPE)
    Ho = (H + 2 - 3) // 2 + 1
    Wo = (W + 2 - 3) // 2 + 1
    neg = float(jnp.finfo(jnp.bfloat16).min)
    xp = jnp.pad(x, ((0, 0), (1, 1), (1, 1), (0, 0)), constant_values=neg)
    # Column-direction 3-tap max with stride 2 (fused strided slices in XLA).
    c0 = xp[:, :, 0:2 * Wo:2, :]
    c1 = xp[:, :, 1:1 + 2 * Wo:2, :]
    c2 = xp[:, :, 2:2 + 2 * Wo:2, :]
    cm = jnp.maximum(jnp.maximum(c0, c1), c2)        # (N, H+2, Wo, C)

    out = pl.pallas_call(
        functools.partial(_maxpool_rows_kernel, ho=Ho),
        out_shape=jax.ShapeDtypeStruct((N, Ho, Wo, C), x.dtype),
        grid_spec=pltpu.PrefetchScalarGridSpec(
            num_scalar_prefetch=0,
            grid=(N,),
            in_specs=[pl.BlockSpec((1, H + 2, Wo, C),
                                   lambda n: (n, 0, 0, 0))],
            out_specs=pl.BlockSpec((1, Ho, Wo, C), lambda n: (n, 0, 0, 0)),
        ),
        compiler_params=pltpu.CompilerParams(
            dimension_semantics=("parallel",),
            vmem_limit_bytes=VMEM_LIMIT_BYTES,
        ),
    )(cm)
    return out


def _avgpool_kernel(x_ref, o_ref, *, inv_hw):
    o_ref[...] = jnp.sum(x_ref[...].astype(jnp.float32), axis=1) * inv_hw


def global_avg_pool(x):
    """NHWC -> (N, C): AdaptiveAvgPool2d((1,1)) + flatten."""
    N, H, W, C = x.shape
    hw = H * W
    xr = x.reshape(N, hw, C)
    # Tiny op: one grid step unless the whole batch would not fit VMEM.
    nb = N if N * hw * C * 2 <= 8 * 1024 * 1024 else 1
    out = pl.pallas_call(
        functools.partial(_avgpool_kernel, inv_hw=1.0 / hw),
        out_shape=jax.ShapeDtypeStruct((N, C), jnp.float32),
        grid_spec=pltpu.PrefetchScalarGridSpec(
            num_scalar_prefetch=0,
            grid=(N // nb,),
            in_specs=[pl.BlockSpec((nb, hw, C), lambda i: (i, 0, 0))],
            out_specs=pl.BlockSpec((nb, C), lambda i: (i, 0)),
        ),
        compiler_params=pltpu.CompilerParams(
            dimension_semantics=("parallel",),
            vmem_limit_bytes=VMEM_LIMIT_BYTES,
        ),
    )(xr)
    return out


# -----------------------------------------------------------------------------
# Convolution dispatch: direct kernel / 1x1 GEMM / im2col + GEMM fallback
# -----------------------------------------------------------------------------
def _extract_patches(x, kh, kw, stride, padding):
    """x: NHWC -> (N, Ho, Wo, kh*kw*C) patches, ordered (dy, dx, c)."""
    xpad = jnp.pad(x, ((0, 0), (padding, padding), (padding, padding), (0, 0)))
    N, Hp, Wp, C = xpad.shape
    Ho = (Hp - kh) // stride + 1
    Wo = (Wp - kw) // stride + 1
    cols = []
    for dy in range(kh):
        for dx in range(kw):
            cols.append(
                xpad[:, dy:dy + stride * (Ho - 1) + 1:stride,
                     dx:dx + stride * (Wo - 1) + 1:stride, :])
    return jnp.concatenate(cols, axis=-1), Ho, Wo


def conv_bn_act(x, p, stride, padding, relu=True, residual=None):
    kh, kw = p["kh"], p["kw"]
    N, _, W, Cin = x.shape
    Cout = p["w"].shape[-1]

    if (kh == 3 and kw == 3 and stride == 1 and padding == 1 and relu
            and residual is None and W % 8 == 0
            and _pick_n_tile(Cout) is not None):
        return conv3x3_bn_relu_direct(x, p)

    if kh == 1 and kw == 1:
        xs = x[:, ::stride, ::stride, :] if stride > 1 else x
        _, Ho, Wo, _ = xs.shape
        cols = xs.reshape(N * Ho * Wo, Cin)
    else:
        # TODO(synk): extend the direct halo-DMA kernel to stride-2 3x3 and the
        # 7x7 stem so these layers also skip the HBM im2col blow-up.
        patches, Ho, Wo = _extract_patches(x.astype(ACT_DTYPE), kh, kw,
                                           stride, padding)
        cols = patches.reshape(N * Ho * Wo, kh * kw * Cin)

    res2 = None if residual is None else residual.reshape(N * Ho * Wo, -1)
    y = matmul_bn_act(cols, p["w"], p["scale"], p["bias"],
                      activation="relu" if relu else "none", residual=res2)
    return y.reshape(N, Ho, Wo, -1)


def bottleneck(x, blk):
    stride = blk["stride"]
    out = conv_bn_act(x, blk["conv1"], stride=1, padding=0, relu=True)
    out = conv_bn_act(out, blk["conv2"], stride=stride, padding=1, relu=True)
    if "downsample" in blk:
        identity = conv_bn_act(x, blk["downsample"], stride=stride, padding=0,
                               relu=False)
    else:
        identity = x
    # conv3: 1x1 GEMM with residual add + ReLU fused into the epilogue.
    out = conv_bn_act(out, blk["conv3"], stride=1, padding=0, relu=True,
                      residual=identity)
    return out


# -----------------------------------------------------------------------------
# Parameter init (deterministic, synthetic; eval-mode BN folded to scale/bias)
# -----------------------------------------------------------------------------
def init_resnet50_multifc_params(key, num_outputs):
    keys = iter(jax.random.split(key, 256))

    def conv_p(kh, kw, cin, cout):
        k1, k2, k3 = next(keys), next(keys), next(keys)
        fan_in = kh * kw * cin
        w = (jax.random.normal(k1, (fan_in, cout), jnp.float32)
             * jnp.sqrt(2.0 / fan_in)).astype(jnp.bfloat16)
        scale = 1.0 + 0.01 * jax.random.normal(k2, (cout,), jnp.float32)
        bias = 0.01 * jax.random.normal(k3, (cout,), jnp.float32)
        return {"w": w, "scale": scale, "bias": bias, "kh": kh, "kw": kw}

    params = {"conv1": conv_p(7, 7, 3, 64)}
    layer_cfg = [(64, 3, 1), (128, 4, 2), (256, 6, 2), (512, 3, 2)]
    in_c = 64
    layers = []
    for planes, blocks, stride in layer_cfg:
        blist = []
        for b in range(blocks):
            s = stride if b == 0 else 1
            blk = {
                "conv1": conv_p(1, 1, in_c, planes),
                "conv2": conv_p(3, 3, planes, planes),
                "conv3": conv_p(1, 1, planes, planes * 4),
                "stride": s,
            }
            if s != 1 or in_c != planes * 4:
                blk["downsample"] = conv_p(1, 1, in_c, planes * 4)
            blist.append(blk)
            in_c = planes * 4
        layers.append(blist)
    params["layers"] = layers

    # num_outputs x Linear(2048, 1) heads stacked into one (2048, num_outputs).
    kw_, kb_ = next(keys), next(keys)
    params["fc_w"] = (jax.random.normal(kw_, (in_c, num_outputs), jnp.float32)
                      / jnp.sqrt(in_c)).astype(jnp.bfloat16)
    params["fc_b"] = 0.01 * jax.random.normal(kb_, (num_outputs,), jnp.float32)
    params["num_outputs"] = num_outputs
    return params


# -----------------------------------------------------------------------------
# Full forward: ResNet50 backbone (fc removed) + num_outputs FC heads
# -----------------------------------------------------------------------------
def resnet50_multifc_forward(x_nchw, params):
    num_outputs = params["num_outputs"]
    x = jnp.transpose(x_nchw, (0, 2, 3, 1)).astype(ACT_DTYPE)   # NCHW -> NHWC
    x = conv_bn_act(x, params["conv1"], stride=2, padding=3, relu=True)
    x = maxpool_3x3_s2_p1(x)
    for layer in params["layers"]:
        for blk in layer:
            x = bottleneck(x, blk)
    feats = global_avg_pool(x)                                   # (N, 2048) f32

    # All heads as one lane-dense GEMM (pad heads to 128 lanes, slice once).
    fc_w, fc_b = params["fc_w"], params["fc_b"]
    npad = (-num_outputs) % 128
    if npad:
        fc_w = jnp.pad(fc_w, ((0, 0), (0, npad)))
        fc_b = jnp.pad(fc_b, (0, npad))
    ones = jnp.ones((fc_w.shape[1],), jnp.float32)
    logits = matmul_bn_act(feats, fc_w, ones, fc_b, activation="none",
                           out_dtype=jnp.float32,
                           tk=feats.shape[1])                    # single K step
    logits = logits[:, :num_outputs]
    # Tuple of (N, 1) outputs, one per head — matches (*outputs,)
    return tuple(logits[:, i:i + 1] for i in range(num_outputs))


if __name__ == "__main__":
    num_outputs = 3
    key = jax.random.PRNGKey(0)
    kx, kp = jax.random.split(key)
    # Small ResNet-50-compatible input: batch=2, 3 channels, 32x32 spatial (NCHW).
    x = jax.random.normal(kx, (2, 3, 32, 32), jnp.float32)
    params = init_resnet50_multifc_params(kp, num_outputs)

    outs = resnet50_multifc_forward(x, params)
    outs = jax.block_until_ready(outs)

    assert isinstance(outs, tuple) and len(outs) == num_outputs
    for o in outs:
        assert o.shape == (2, 1) and o.dtype == jnp.float32
        assert bool(jnp.all(jnp.isfinite(o)))
    print("KERNEL_OK")
</pallas_src>

<mosaic_0001>
module attributes {stable_mosaic.version = 11 : i64} {
  func.func @_gemm_bn_act_single_kernel(%arg0: i32, %arg1: i32, %arg2: memref<256x147xbf16, #tpu.memory_space<vmem>>, %arg3: memref<147x64xbf16, #tpu.memory_space<vmem>>, %arg4: memref<1x64xf32, #tpu.memory_space<vmem>>, %arg5: memref<1x64xf32, #tpu.memory_space<vmem>>, %arg6: memref<256x64xbf16, #tpu.memory_space<vmem>>) attributes {dimension_semantics = [#tpu.dimension_semantics<parallel>, #tpu.dimension_semantics<parallel>], iteration_bounds = array<i64: 2, 1>, scalar_prefetch = 0 : i64, scratch_operands = 0 : i64, tpu.core_type = #tpu.core_type<tc>, window_params = [{transform_indices = @transform_0, window_bounds = array<i64: 256, 147>}, {transform_indices = @transform_1, window_bounds = array<i64: 147, 64>}, {transform_indices = @transform_2, window_bounds = array<i64: 1, 64>}, {transform_indices = @transform_3, window_bounds = array<i64: 1, 64>}, {transform_indices = @transform_4, window_bounds = array<i64: 256, 64>}]} {
    %c0 = arith.constant 0 : index
    %c0_0 = arith.constant 0 : index
    %0 = vector.load %arg2[%c0, %c0_0] : memref<256x147xbf16, #tpu.memory_space<vmem>>, vector<256x147xbf16>
    %c0_1 = arith.constant 0 : index
    %c0_2 = arith.constant 0 : index
    %1 = vector.load %arg3[%c0_1, %c0_2] : memref<147x64xbf16, #tpu.memory_space<vmem>>, vector<147x64xbf16>
    %cst = arith.constant dense<0.000000e+00> : vector<256x64xf32>
    %2 = tpu.matmul %0, %1, %cst {dimension_numbers = #tpu.dot_dimension_numbers<[1], [0], [0], [1], [0, 0, 1, 1], [], []>} : vector<256x147xbf16>, vector<147x64xbf16>, vector<256x64xf32> -> vector<256x64xf32>
    %c0_3 = arith.constant 0 : index
    %c0_4 = arith.constant 0 : index
    %3 = vector.load %arg4[%c0_3, %c0_4] : memref<1x64xf32, #tpu.memory_space<vmem>>, vector<1x64xf32>
    %4 = vector.broadcast %3 : vector<1x64xf32> to vector<256x64xf32>
    %5 = arith.mulf %2, %4 : vector<256x64xf32>
    %c0_5 = arith.constant 0 : index
    %c0_6 = arith.constant 0 : index
    %6 = vector.load %arg5[%c0_5, %c0_6] : memref<1x64xf32, #tpu.memory_space<vmem>>, vector<1x64xf32>
    %7 = vector.broadcast %6 : vector<1x64xf32> to vector<256x64xf32>
    %8 = arith.addf %5, %7 : vector<256x64xf32>
    %cst_7 = arith.constant 0.000000e+00 : f32
    %9 = vector.broadcast %cst_7 : f32 to vector<256x64xf32>
    %10 = arith.maximumf %8, %9 : vector<256x64xf32>
    %11 = arith.truncf %10 : vector<256x64xf32> to vector<256x64xbf16>
    %c0_8 = arith.constant 0 : index
    %c0_9 = arith.constant 0 : index
    %12 = vector.load %arg6[%c0_8, %c0_9] : memref<256x64xbf16, #tpu.memory_space<vmem>>, vector<256x64xbf16>
    tpu.vector_store %arg6[%c0_8, %c0_9], %11 {strides = array<i32>} : memref<256x64xbf16, #tpu.memory_space<vmem>>, vector<256x64xbf16>,
    return
  }
  func.func @transform_0(%arg0: i32, %arg1: i32) -> (i32, i32) {
    %c0_i32 = arith.constant 0 : i32
    %c0_i32_0 = arith.constant 0 : i32
    return %arg0, %c0_i32 : i32, i32
  }
  func.func @transform_1(%arg0: i32, %arg1: i32) -> (i32, i32) {
    %c0_i32 = arith.constant 0 : i32
    %c0_i32_0 = arith.constant 0 : i32
    return %c0_i32, %arg1 : i32, i32
  }
  func.func @transform_2(%arg0: i32, %arg1: i32) -> (i32, i32) {
    %c0_i32 = arith.constant 0 : i32
    %c0_i32_0 = arith.constant 0 : i32
    return %c0_i32, %arg1 : i32, i32
  }
  func.func @transform_3(%arg0: i32, %arg1: i32) -> (i32, i32) {
    %c0_i32 = arith.constant 0 : i32
    %c0_i32_0 = arith.constant 0 : i32
    return %c0_i32, %arg1 : i32, i32
  }
  func.func @transform_4(%arg0: i32, %arg1: i32) -> (i32, i32) {
    %c0_i32 = arith.constant 0 : i32
    return %arg0, %arg1 : i32, i32
  }
}

</mosaic_0001>

<llo_original>
// kernel: tpu_custom_call.1
$region0: #{tpu_custom_call.1}
  #allocation0 [shape = 'u32[]', space=smem, size = 0x4, offset = 0x4, fixed_abs, tag = 'smem constant byte address 0x4 - core index']
  #allocation1 [shape = 'u32[144,128]{1,0:T(1,128)}', space=vmem, size = 0x12000, scoped, tag = 'internal scratch']
  %s0 = inlined_call_operand.vmem [shape: bf16[512,147], index: 0, kind: input, shape index: {}]
  %s1 = inlined_call_operand.vmem [shape: bf16[147,64], index: 1, kind: input, shape index: {}]
  %s2 = inlined_call_operand.vmem [shape: f32[1,64], index: 2, kind: input, shape index: {}]
  %s3 = inlined_call_operand.vmem [shape: f32[1,64], index: 3, kind: input, shape index: {}]
  %s4 = inlined_call_operand.vmem [shape: bf16[512,64], index: 4, kind: output, shape index: {}]
  %s5 = sld [smem:[#allocation0]]
  $region49: #{tpu_custom_call.1} parent=0
    _
  %s7 = ssub.s32 1, %s5
  %s8 = scalar_select 0, %s7, %s5
  loop: start=0, step=1, limit=4
  $region2: #{tpu_custom_call.1} parent=0 // loop_pre_header
    _
  $region3: #{tpu_custom_call.1} parent=0 // loop_header
    %s10 = sphi 0, %s14
    %p11 = scmp.ge.s32.totalorder %s10, 4
    %s17 = sphi 0, %s29
    %s18 = sphi 0, %s25
    %s19 = sphi 0, %s17
    %s20 = sphi 0, %s18
    %s21 = sphi 0, %s19
    %s22 = sphi 0, %s20
    %s32 = sphi 0, %s34
    %s35 = sphi 0, %s32
    %s36 = sphi 0, %s35
    %s52 = sphi 0, %s36
    %s58 = sphi 0, %s60
    %s61 = sphi 0, %s58
    %s62 = sphi 0, %s61
    %s78 = sphi 0, %s62
    %s84 = sphi 0, %s86
    %s87 = sphi 0, %s84
    %s88 = sphi 0, %s87
    %s104 = sphi 0, %s88
    %s110 = sphi 0, %s112
    %s113 = sphi 0, %s110
    %s114 = sphi 0, %s113
    %s130 = sphi 0, %s114
    %s138 = sphi 0, %s140
    %s141 = sphi 0, %s138
    %s142 = sphi 0, %s141
    %s158 = sphi 0, %s142
  $region4: #{tpu_custom_call.1} parent=0 // loop_header_branch
    %13 = sbr.rel (%p11) target = $region8
  $region5: #{tpu_custom_call.1} parent=0 // loop_body
    %s15 = ssub.s32 %s10, 1
    %s16 = ssub.s32 %s10, 2
    %s23 = sadd.s32 1, %s18
    %p24 = scmp.ge.s32.totalorder %s23, 1
    %s25 = scalar_select %p24, 0, %s23
    %s26 = sadd.s32 1, %s17
    %s27 = scalar_select %p24, %s26, %s17
    %p28 = scmp.ge.s32.totalorder %s27, 2
    %s29 = scalar_select %p28, 0, %s27
    %s30 = ssub.s32 %s17, %s29
    %p31 = scmp.eq.s32.totalorder %s30, 0
    %s33 = sadd.s32 %s32, 1
    %s34 = scalar_select %p31, %s32, %s33
    %p37 = pneg %p31
    %p38 = scmp.eq.s32.totalorder %s10, 1
    %p39 = por %p37, %p38
    %p40 = scmp.ne.s32.totalorder %s32, %s35
    %p41 = scmp.eq.s32.totalorder %s10, 0
    %p42 = por %p40, %p41
    %p43 = scmp.ne.s32.totalorder %s32, %s35
    %p44 = scmp.eq.s32.totalorder %s15, 1
    %p45 = por %p43, %p44
    %p46 = scmp.ne.s32.totalorder %s35, %s36
    %p47 = scmp.eq.s32.totalorder %s15, 0
    %p48 = por %p46, %p47
    %p49 = scmp.ne.s32.totalorder %s35, %s36
    %p50 = scmp.eq.s32.totalorder %s16, 1
    %p51 = por %p49, %p50
    %p53 = scmp.ne.s32.totalorder %s36, %s52
    %p54 = scmp.eq.s32.totalorder %s16, 0
    %p55 = por %p53, %p54
    %s56 = ssub.s32 %s18, %s25
    %p57 = scmp.eq.s32.totalorder %s56, 0
    %s59 = sadd.s32 %s58, 1
    %s60 = scalar_select %p57, %s58, %s59
    %p63 = pneg %p57
    %p64 = scmp.eq.s32.totalorder %s10, 1
    %p65 = por %p63, %p64
    %p66 = scmp.ne.s32.totalorder %s58, %s61
    %p67 = scmp.eq.s32.totalorder %s10, 0
    %p68 = por %p66, %p67
    %p69 = scmp.ne.s32.totalorder %s58, %s61
    %p70 = scmp.eq.s32.totalorder %s15, 1
    %p71 = por %p69, %p70
    %p72 = scmp.ne.s32.totalorder %s61, %s62
    %p73 = scmp.eq.s32.totalorder %s15, 0
    %p74 = por %p72, %p73
    %p75 = scmp.ne.s32.totalorder %s61, %s62
    %p76 = scmp.eq.s32.totalorder %s16, 1
    %p77 = por %p75, %p76
    %p79 = scmp.ne.s32.totalorder %s62, %s78
    %p80 = scmp.eq.s32.totalorder %s16, 0
    %p81 = por %p79, %p80
    %s82 = ssub.s32 %s18, %s25
    %p83 = scmp.eq.s32.totalorder %s82, 0
    %s85 = sadd.s32 %s84, 1
    %s86 = scalar_select %p83, %s84, %s85
    %p89 = pneg %p83
    %p90 = scmp.eq.s32.totalorder %s10, 1
    %p91 = por %p89, %p90
    %p92 = scmp.ne.s32.totalorder %s84, %s87
    %p93 = scmp.eq.s32.totalorder %s10, 0
    %p94 = por %p92, %p93
    %p95 = scmp.ne.s32.totalorder %s84, %s87
    %p96 = scmp.eq.s32.totalorder %s15, 1
    %p97 = por %p95, %p96
    %p98 = scmp.ne.s32.totalorder %s87, %s88
    %p99 = scmp.eq.s32.totalorder %s15, 0
    %p100 = por %p98, %p99
    %p101 = scmp.ne.s32.totalorder %s87, %s88
    %p102 = scmp.eq.s32.totalorder %s16, 1
    %p103 = por %p101, %p102
    %p105 = scmp.ne.s32.totalorder %s88, %s104
    %p106 = scmp.eq.s32.totalorder %s16, 0
    %p107 = por %p105, %p106
    %s108 = ssub.s32 %s18, %s25
    %p109 = scmp.eq.s32.totalorder %s108, 0
    %s111 = sadd.s32 %s110, 1
    %s112 = scalar_select %p109, %s110, %s111
    %p115 = pneg %p109
    %p116 = scmp.eq.s32.totalorder %s10, 1
    %p117 = por %p115, %p116
    %p118 = scmp.ne.s32.totalorder %s110, %s113
    %p119 = scmp.eq.s32.totalorder %s10, 0
    %p120 = por %p118, %p119
    %p121 = scmp.ne.s32.totalorder %s110, %s113
    %p122 = scmp.eq.s32.totalorder %s15, 1
    %p123 = por %p121, %p122
    %p124 = scmp.ne.s32.totalorder %s113, %s114
    %p125 = scmp.eq.s32.totalorder %s15, 0
    %p126 = por %p124, %p125
    %p127 = scmp.ne.s32.totalorder %s113, %s114
    %p128 = scmp.eq.s32.totalorder %s16, 1
    %p129 = por %p127, %p128
    %p131 = scmp.ne.s32.totalorder %s114, %s130
    %p132 = scmp.eq.s32.totalorder %s16, 0
    %p133 = por %p131, %p132
    %s134 = ssub.s32 %s17, %s29
    %s135 = ssub.s32 %s18, %s25
    %s136 = sor.u32 %s134, %s135
    %p137 = scmp.eq.s32.totalorder %s136, 0
    %s139 = sadd.s32 %s138, 1
    %s140 = scalar_select %p137, %s138, %s139
    %p143 = pneg %p137
    %p144 = scmp.eq.s32.totalorder %s10, 1
    %p145 = por %p143, %p144
    %p146 = scmp.ne.s32.totalorder %s138, %s141
    %p147 = scmp.eq.s32.totalorder %s10, 0
    %p148 = por %p146, %p147
    %p149 = scmp.ne.s32.totalorder %s138, %s141
    %p150 = scmp.eq.s32.totalorder %s15, 1
    %p151 = por %p149, %p150
    %p152 = scmp.ne.s32.totalorder %s141, %s142
    %p153 = scmp.eq.s32.totalorder %s15, 0
    %p154 = por %p152, %p153
    %p155 = scmp.ne.s32.totalorder %s141, %s142
    %p156 = scmp.eq.s32.totalorder %s16, 1
    %p157 = por %p155, %p156
    %p159 = scmp.ne.s32.totalorder %s142, %s158
    %p160 = scmp.eq.s32.totalorder %s16, 0
    %p161 = por %p159, %p160
    %p162 = scmp.le.s32.totalorder 1, %s10
    %p163 = scmp.lt.s32.totalorder %s10, 3
    %p164 = pnand %p162, %p163
    %p165 = pneg %p164
    // Predicated region
    $region9: #{tpu_custom_call.1} parent=5 // pred_check
      _
    $region10: #{tpu_custom_call.1} parent=5 // pred_check_branch
      %167 = sbr.rel (%p164) target = $region12
    $region11: #{tpu_custom_call.1} parent=5 // pred_region
      %s168 = ssub.s32 %s10, 1
      // Predicated region
      $region13: #{tpu_custom_call.1} parent=11 // pred_check
        %p169 = pneg %p74
      $region14: #{tpu_custom_call.1} parent=11 // pred_check_branch
        %171 = sbr.rel (%p169) target = $region16
      $region15: #{tpu_custom_call.1} parent=11 // pred_region
        %p172 = scmp.lt.s32.totalorder %s20, 0
        %s173 = scalar_select %p172, %s20, 0
        %s174 = smul.addr %s173, 4
        %s175 = scalar_lea.vmem %s1, %s174
      $region16: #{tpu_custom_call.1} parent=11 // pred_fallthru
        _
      // Predicated region
      $region17: #{tpu_custom_call.1} parent=11 // pred_check
        %p176 = pneg %p100
      $region18: #{tpu_custom_call.1} parent=11 // pred_check_branch
        %178 = sbr.rel (%p176) target = $region20
      $region19: #{tpu_custom_call.1} parent=11 // pred_region
        %p179 = scmp.lt.s32.totalorder %s20, 0
        %s180 = scalar_select %p179, %s20, 0
        %s181 = scalar_lea.vmem %s2, %s180
      $region20: #{tpu_custom_call.1} parent=11 // pred_fallthru
        _
      // Predicated region
      $region21: #{tpu_custom_call.1} parent=11 // pred_check
        %p182 = pneg %p126
      $region22: #{tpu_custom_call.1} parent=11 // pred_check_branch
        %184 = sbr.rel (%p182) target = $region24
      $region23: #{tpu_custom_call.1} parent=11 // pred_region
        %p185 = scmp.lt.s32.totalorder %s20, 0
        %s186 = scalar_select %p185, %s20, 0
        %s187 = scalar_lea.vmem %s3, %s186
      $region24: #{tpu_custom_call.1} parent=11 // pred_fallthru
        _
    $region12: #{tpu_custom_call.1} parent=5 // pred_fallthru
      _
    %p188 = scmp.lt.s32.totalorder %s10, 2
    // Predicated region
    $region25: #{tpu_custom_call.1} parent=5 // pred_check
      %p189 = pneg %p188
    $region26: #{tpu_custom_call.1} parent=5 // pred_check_branch
      %191 = sbr.rel (%p189) target = $region28
    $region27: #{tpu_custom_call.1} parent=5 // pred_region
      // Predicated region
      $region29: #{tpu_custom_call.1} parent=27 // pred_check
        %p192 = pneg %p42
      $region30: #{tpu_custom_call.1} parent=27 // pred_check_branch
        %194 = sbr.rel (%p192) target = $region32
      $region31: #{tpu_custom_call.1} parent=27 // pred_region
        %s195 = smul.u32 32, %s17
        %p196 = scmp.lt.s32.totalorder %s195, 63
        %s197 = scalar_select %p196, %s195, 63
        %s198 = smul.addr %s197, 2
        %s199 = smul.addr %s198, 4
        %s200 = scalar_lea.vmem %s0, %s199
        %s201 = smul.u32 32, %s17
      $region32: #{tpu_custom_call.1} parent=27 // pred_fallthru
        _
    $region28: #{tpu_custom_call.1} parent=5 // pred_fallthru
      _
    %p202 = scmp.le.s32.totalorder 1, %s10
    %p203 = scmp.lt.s32.totalorder %s10, 3
    %p204 = pnand %p202, %p203
    %p205 = pneg %p204
    // Predicated region
    $region33: #{tpu_custom_call.1} parent=5 // pred_check
      _
    $region34: #{tpu_custom_call.1} parent=5 // pred_check_branch
      %207 = sbr.rel (%p204) target = $region36
    $region35: #{tpu_custom_call.1} parent=5 // pred_region
      %s208 = ssub.s32 %s10, 1
      %s209 = smul.u32 32, %s19
      %p210 = scmp.lt.s32.totalorder %s209, 63
      %s211 = scalar_select %p210, %s209, 63
      %s212 = smul.addr %s211, 2
      %s213 = smul.addr %s212, 4
      %s214 = scalar_lea.vmem %s0, %s213
      %p215 = pneg %p48
      %p216 = pneg %p45
      %p217 = scmp.lt.s32.totalorder %s20, 0
      %s218 = scalar_select %p217, %s20, 0
      %s219 = smul.addr %s218, 4
      %s220 = scalar_lea.vmem %s1, %s219
      %p221 = pneg %p74
      %p222 = pneg %p71
      %p223 = scmp.lt.s32.totalorder %s20, 0
      %s224 = scalar_select %p223, %s20, 0
      %s225 = scalar_lea.vmem %s2, %s224
      %p226 = pneg %p100
      %p227 = pneg %p97
      %p228 = scmp.lt.s32.totalorder %s20, 0
      %s229 = scalar_select %p228, %s20, 0
      %s230 = scalar_lea.vmem %s3, %s229
      %p231 = pneg %p126
      %p232 = pneg %p123
      %p233 = pneg %p154
      %p234 = pneg %p151
      %s235 = smul.u32 32, %s19
      %p236 = scmp.lt.s32.totalorder %s235, 63
      %s237 = scalar_select %p236, %s235, 63
      %p238 = scmp.lt.s32.totalorder %s20, 0
      %s239 = scalar_select %p238, %s20, 0
      %s240 = sadd.s32 %s239, %s237
      %s241 = smul.addr %s240, 4
      %s242 = scalar_lea.vmem %s4, %s241
      %s243 = smul.u32 32, %s19
      %p244 = scmp.lt.s32.totalorder %s243, 63
      %s245 = scalar_select %p244, %s243, 63
      %s246 = smul.addr %s245, 2
      %s247 = smul.addr %s246, 4
      %s248 = scalar_lea.vmem %s0, %s247
      %s249 = smul.u32 32, %s19
      %p250 = scmp.lt.s32.totalorder %s20, 0
      %s251 = scalar_select %p250, %s20, 0
      %s252 = smul.addr %s251, 4
      %s253 = scalar_lea.vmem %s1, %s252
      %p254 = scmp.lt.s32.totalorder %s20, 0
      %s255 = scalar_select %p254, %s20, 0
      %s256 = scalar_lea.vmem %s2, %s255
      %p257 = scmp.lt.s32.totalorder %s20, 0
      %s258 = scalar_select %p257, %s20, 0
      %s259 = scalar_lea.vmem %s3, %s258
      %s260 = smul.u32 32, %s19
      %p261 = scmp.lt.s32.totalorder %s260, 63
      %s262 = scalar_select %p261, %s260, 63
      %p263 = scmp.lt.s32.totalorder %s20, 0
      %s264 = scalar_select %p263, %s20, 0
      %s265 = sadd.s32 %s264, %s262
      %s266 = smul.addr %s265, 4
      %s267 = scalar_lea.vmem %s4, %s266
      %s268 = smul.u32 32, %s19
      %v270 = vld [vmem:[%s248] sm:$0xff]
      %v271 = vld [vmem:[%s248 + $0x8] sm:$0xff]
      %v272 = vld [vmem:[%s248 + $0x10] sm:$0xff]
      %v273 = vld [vmem:[%s248 + $0x18] sm:$0xff]
      %v274 = vld [vmem:[%s248 + $0x20] sm:$0xff]
      %v275 = vld [vmem:[%s248 + $0x28] sm:$0xff]
      %v276 = vld [vmem:[%s248 + $0x30] sm:$0xff]
      %v277 = vld [vmem:[%s248 + $0x38] sm:$0xff]
      %v278 = vld [vmem:[%s248 + $0x40] sm:$0xff]
      %v279 = vld [vmem:[%s248 + $0x48] sm:$0xff]
      %v280 = vld [vmem:[%s248 + $0x50] sm:$0xff]
      %v281 = vld [vmem:[%s248 + $0x58] sm:$0xff]
      %v282 = vld [vmem:[%s248 + $0x60] sm:$0xff]
      %v283 = vld [vmem:[%s248 + $0x68] sm:$0xff]
      %v284 = vld [vmem:[%s248 + $0x70] sm:$0xff]
      %v285 = vld [vmem:[%s248 + $0x78] sm:$0xff]
      %v286 = vld [vmem:[%s248 + $0x80] sm:$0xff]
      %v287 = vld [vmem:[%s248 + $0x88] sm:$0xff]
      %v288 = vld [vmem:[%s248 + $0x90] sm:$0xff]
      %v289 = vld [vmem:[%s248 + $0x98] sm:$0xff]
      %v290 = vld [vmem:[%s248 + $0xa0] sm:$0xff]
      %v291 = vld [vmem:[%s248 + $0xa8] sm:$0xff]
      %v292 = vld [vmem:[%s248 + $0xb0] sm:$0xff]
      %v293 = vld [vmem:[%s248 + $0xb8] sm:$0xff]
      %v294 = vld [vmem:[%s248 + $0xc0] sm:$0xff]
      %v295 = vld [vmem:[%s248 + $0xc8] sm:$0xff]
      %v296 = vld [vmem:[%s248 + $0xd0] sm:$0xff]
      %v297 = vld [vmem:[%s248 + $0xd8] sm:$0xff]
      %v298 = vld [vmem:[%s248 + $0xe0] sm:$0xff]
      %v299 = vld [vmem:[%s248 + $0xe8] sm:$0xff]
      %v300 = vld [vmem:[%s248 + $0xf0] sm:$0xff]
      %v301 = vld [vmem:[%s248 + $0xf8] sm:$0xff]
      %v302 = vld [vmem:[%s253] sm:$0xf]
      %v303 = vld [vmem:[%s253 + $0x4] sm:$0xf]
      %v304 = vld [vmem:[%s253 + $0x8] sm:$0xf]
      %v305 = vld [vmem:[%s253 + $0xc] sm:$0xf]
      %v306 = vld [vmem:[%s253 + $0x10] sm:$0xf]
      %v307 = vld [vmem:[%s253 + $0x14] sm:$0xf]
      %v308 = vld [vmem:[%s253 + $0x18] sm:$0xf]
      %v309 = vld [vmem:[%s253 + $0x1c] sm:$0xf]
      %v310 = vld [vmem:[%s253 + $0x20] sm:$0xf]
      %v311 = vld [vmem:[%s253 + $0x24] sm:$0xf]
      %v312 = vld [vmem:[%s253 + $0x28] sm:$0xf]
      %v313 = vld [vmem:[%s253 + $0x2c] sm:$0xf]
      %v314 = vld [vmem:[%s253 + $0x30] sm:$0xf]
      %v315 = vld [vmem:[%s253 + $0x34] sm:$0xf]
      %v316 = vld [vmem:[%s253 + $0x38] sm:$0xf]
      %v317 = vld [vmem:[%s253 + $0x3c] sm:$0xf]
      %v318 = vld [vmem:[%s253 + $0x40] sm:$0xf]
      %v319 = vld [vmem:[%s253 + $0x44] sm:$0xf]
      %v320 = vld [vmem:[%s253 + $0x48] sm:$0x3]
      %v353 = vunpack.c.l.b16 %v270
      %v354 = vunpack.c.h.b16 %v270
      %v355 = vunpack.c.l.b16 %v271
      %v356 = vunpack.c.h.b16 %v271
      %v357 = vunpack.c.l.b16 %v272
      %v358 = vunpack.c.h.b16 %v272
      %v359 = vunpack.c.l.b16 %v273
      %v360 = vunpack.c.h.b16 %v273
      %v361 = vunpack.c.l.b16 %v274
      %v362 = vunpack.c.h.b16 %v274
      %v363 = vunpack.c.l.b16 %v275
      %v364 = vunpack.c.h.b16 %v275
      %v365 = vunpack.c.l.b16 %v276
      %v366 = vunpack.c.h.b16 %v276
      %v367 = vunpack.c.l.b16 %v277
      %v368 = vunpack.c.h.b16 %v277
      %v369 = vunpack.c.l.b16 %v278
      %v370 = vunpack.c.h.b16 %v278
      %v371 = vunpack.c.l.b16 %v279
      %v372 = vunpack.c.h.b16 %v279
      %v373 = vunpack.c.l.b16 %v280
      %v374 = vunpack.c.h.b16 %v280
      %v375 = vunpack.c.l.b16 %v281
      %v376 = vunpack.c.h.b16 %v281
      %v377 = vunpack.c.l.b16 %v282
      %v378 = vunpack.c.h.b16 %v282
      %v379 = vunpack.c.l.b16 %v283
      %v380 = vunpack.c.h.b16 %v283
      %v381 = vunpack.c.l.b16 %v284
      %v382 = vunpack.c.h.b16 %v284
      %v383 = vunpack.c.l.b16 %v285
      %v384 = vunpack.c.h.b16 %v285
      %v385 = vunpack.c.l.b16 %v286
      %v386 = vunpack.c.h.b16 %v286
      %v387 = vunpack.c.l.b16 %v287
      %v388 = vunpack.c.h.b16 %v287
      %v389 = vunpack.c.l.b16 %v288
      %v390 = vunpack.c.h.b16 %v288
      %v391 = vunpack.c.l.b16 %v289
      %v392 = vunpack.c.h.b16 %v289
      %v393 = vunpack.c.l.b16 %v290
      %v394 = vunpack.c.h.b16 %v290
      %v395 = vunpack.c.l.b16 %v291
      %v396 = vunpack.c.h.b16 %v291
      %v397 = vunpack.c.l.b16 %v292
      %v398 = vunpack.c.h.b16 %v292
      %v399 = vunpack.c.l.b16 %v293
      %v400 = vunpack.c.h.b16 %v293
      %v401 = vunpack.c.l.b16 %v294
      %v402 = vunpack.c.h.b16 %v294
      %v403 = vunpack.c.l.b16 %v295
      %v404 = vunpack.c.h.b16 %v295
      %v405 = vunpack.c.l.b16 %v296
      %v406 = vunpack.c.h.b16 %v296
      %v407 = vunpack.c.l.b16 %v297
      %v408 = vunpack.c.h.b16 %v297
      %v409 = vunpack.c.l.b16 %v298
      %v410 = vunpack.c.h.b16 %v298
      %v411 = vunpack.c.l.b16 %v299
      %v412 = vunpack.c.h.b16 %v299
      %v413 = vunpack.c.l.b16 %v300
      %v414 = vunpack.c.h.b16 %v300
      %v415 = vunpack.c.l.b16 %v301
      %v416 = vunpack.c.h.b16 %v301
      %v417 = vpack.c.b16 %v355, %v353
      %v418 = vpack.c.b16 %v356, %v354
      %v419 = vpack.c.b16 %v359, %v357
      %v420 = vpack.c.b16 %v360, %v358
      %v421 = vpack.c.b16 %v363, %v361
      %v422 = vpack.c.b16 %v364, %v362
      %v423 = vpack.c.b16 %v367, %v365
      %v424 = vpack.c.b16 %v368, %v366
      %v425 = vpack.c.b16 %v371, %v369
      %v426 = vpack.c.b16 %v372, %v370
      %v427 = vpack.c.b16 %v375, %v373
      %v428 = vpack.c.b16 %v376, %v374
      %v429 = vpack.c.b16 %v379, %v377
      %v430 = vpack.c.b16 %v380, %v378
      %v431 = vpack.c.b16 %v383, %v381
      %v432 = vpack.c.b16 %v384, %v382
      %v433 = vpack.c.b16 %v387, %v385
      %v434 = vpack.c.b16 %v388, %v386
      %v435 = vpack.c.b16 %v391, %v389
      %v436 = vpack.c.b16 %v392, %v390
      %v437 = vpack.c.b16 %v395, %v393
      %v438 = vpack.c.b16 %v396, %v394
      %v439 = vpack.c.b16 %v399, %v397
      %v440 = vpack.c.b16 %v400, %v398
      %v441 = vpack.c.b16 %v403, %v401
      %v442 = vpack.c.b16 %v404, %v402
      %v443 = vpack.c.b16 %v407, %v405
      %v444 = vpack.c.b16 %v408, %v406
      %v445 = vpack.c.b16 %v411, %v409
      %v446 = vpack.c.b16 %v412, %v410
      %v447 = vpack.c.b16 %v415, %v413
      %v448 = vpack.c.b16 %v416, %v414
      %v484 = vunpack.c.l.b16 %v302
      %v485 = vunpack.c.l.b16 %v303
      %v486 = vunpack.c.l.b16 %v304
      %v487 = vunpack.c.l.b16 %v305
      %v488 = vunpack.c.l.b16 %v306
      %v489 = vunpack.c.l.b16 %v307
      %v490 = vunpack.c.l.b16 %v308
      %v491 = vunpack.c.l.b16 %v309
      %v492 = vunpack.c.l.b16 %v310
      %v493 = vunpack.c.l.b16 %v311
      %v494 = vunpack.c.l.b16 %v312
      %v495 = vunpack.c.l.b16 %v313
      %v496 = vunpack.c.l.b16 %v314
      %v497 = vunpack.c.l.b16 %v315
      %v498 = vunpack.c.l.b16 %v316
      %v499 = vunpack.c.l.b16 %v317
      %v500 = vunpack.c.l.b16 %v318
      %v501 = vunpack.c.l.b16 %v319
      %v502 = vunpack.c.l.b16 %v320
      %v503 = vpack.c.b16 %v485, %v484
      %v504 = vpack.c.b16 %v487, %v486
      %v505 = vpack.c.b16 %v489, %v488
      %v506 = vpack.c.b16 %v491, %v490
      %v507 = vpack.c.b16 %v493, %v492
      %v508 = vpack.c.b16 %v495, %v494
      %v509 = vpack.c.b16 %v497, %v496
      %v510 = vpack.c.b16 %v499, %v498
      %v511 = vpack.c.b16 %v501, %v500
      %v512 = vpack.c.b16 %v502, %v502
      %vm522 = vcmask 154624
      %v524 = vsel %vm522, %v418, 0
      %v527 = vsel %vm522, %v420, 0
      %v530 = vsel %vm522, %v422, 0
      %v533 = vsel %vm522, %v424, 0
      %v536 = vsel %vm522, %v426, 0
      %v539 = vsel %vm522, %v428, 0
      %v542 = vsel %vm522, %v430, 0
      %v545 = vsel %vm522, %v432, 0
      %v548 = vsel %vm522, %v434, 0
      %v551 = vsel %vm522, %v436, 0
      %v554 = vsel %vm522, %v438, 0
      %v557 = vsel %vm522, %v440, 0
      %v560 = vsel %vm522, %v442, 0
      %v563 = vsel %vm522, %v444, 0
      %v566 = vsel %vm522, %v446, 0
      %v569 = vsel %vm522, %v448, 0
      %vm571 = vcmask 1040384
      %vm572 = vcmask 1041408
      %v573 = vsel %vm571, 4294967295, 65535
      %v574 = vsel %vm572, %v573, 0
      %v576 = vand.u32 %v512, %v574
      %578 = vmatprep.subr.bf16.mxu0 0
      %579 = vmatpush1.bf16.msra.mxu0 %v510
      %580 = vmatprep.subr.bf16.mxu0 0
      %581 = vmatpush1.bf16.msra.mxu0 %v509
      %582 = vmatprep.subr.bf16.mxu0 0
      %583 = vmatpush1.bf16.msra.mxu0 %v508
      %584 = vmatprep.subr.bf16.mxu0 0
      %585 = vmatpush1.bf16.msra.mxu0 %v507
      %586 = vmatprep.subr.bf16.mxu0 0
      %587 = vmatpush1.bf16.msra.mxu0 %v506
      %588 = vmatprep.subr.bf16.mxu0 0
      %589 = vmatpush1.bf16.msra.mxu0 %v505
      %590 = vmatprep.subr.bf16.mxu0 0
      %591 = vmatpush1.bf16.msra.mxu0 %v504
      %592 = vmatprep.subr.bf16.mxu0 0
      %593 = vmatpush1.bf16.msra.mxu0 %v503
      %594 = vmatprep.subr.bf16.mxu0 0
      %595 = vmatpush2.bf16.msra.mxu0 0
      %596 = vmatprep.subr.bf16.mxu0 0
      %597 = vmatpush2.bf16.msra.mxu0 0
      %598 = vmatprep.subr.bf16.mxu0 0
      %599 = vmatpush2.bf16.msra.mxu0 0
      %600 = vmatprep.subr.bf16.mxu0 0
      %601 = vmatpush2.bf16.msra.mxu0 0
      %602 = vmatprep.subr.bf16.mxu0 0
      %603 = vmatpush2.bf16.msra.mxu0 0
      %604 = vmatprep.subr.bf16.mxu0 0
      %605 = vmatpush2.bf16.msra.mxu0 0
      %606 = vmatprep.subr.bf16.mxu0 0
      %607 = vmatpush2.bf16.msra.mxu0 %v576
      %608 = vmatprep.subr.bf16.mxu0 0
      %609 = vmatpush2.bf16.msra.mxu0 %v511
      %610 = vmatprep.mubr.bf16.mxu0 %v524
      %611 = vmatmul.mubr.bf16.gmra.mxu0 %v417
      %v612 = vpop.f32.mrf.mxu0
      %v613 = vadd.f32 0.0, %v612
      %v614 = vpop.f32.mrf.mxu0
      %v615 = vpop.f32.mrf.mxu0
      %v616 = vadd.f32 0.0, %v615
      %v617 = vpop.f32.mrf.mxu0
      %618 = vmatprep.mubr.bf16.mxu0 %v527
      %619 = vmatmul.mubr.bf16.gmra.mxu0 %v419
      %v620 = vpop.f32.mrf.mxu0
      %v621 = vadd.f32 0.0, %v620
      %v622 = vpop.f32.mrf.mxu0
      %v623 = vpop.f32.mrf.mxu0
      %v624 = vadd.f32 0.0, %v623
      %v625 = vpop.f32.mrf.mxu0
      %626 = vmatprep.mubr.bf16.mxu0 %v530
      %627 = vmatmul.mubr.bf16.gmra.mxu0 %v421
      %v628 = vpop.f32.mrf.mxu0
      %v629 = vadd.f32 0.0, %v628
      %v630 = vpop.f32.mrf.mxu0
      %v631 = vpop.f32.mrf.mxu0
      %v632 = vadd.f32 0.0, %v631
      %v633 = vpop.f32.mrf.mxu0
      %634 = vmatprep.mubr.bf16.mxu0 %v533
      %635 = vmatmul.mubr.bf16.gmra.mxu0 %v423
      %v636 = vpop.f32.mrf.mxu0
      %v637 = vadd.f32 0.0, %v636
      %v638 = vpop.f32.mrf.mxu0
      %v639 = vpop.f32.mrf.mxu0
      %v640 = vadd.f32 0.0, %v639
      %v641 = vpop.f32.mrf.mxu0
      %642 = vmatprep.mubr.bf16.mxu0 %v536
      %643 = vmatmul.mubr.bf16.gmra.mxu0 %v425
      %v644 = vpop.f32.mrf.mxu0
      %v645 = vadd.f32 0.0, %v644
      %v646 = vpop.f32.mrf.mxu0
      %v647 = vpop.f32.mrf.mxu0
      %v648 = vadd.f32 0.0, %v647
      %v649 = vpop.f32.mrf.mxu0
      %650 = vmatprep.mubr.bf16.mxu0 %v539
      %651 = vmatmul.mubr.bf16.gmra.mxu0 %v427
      %v652 = vpop.f32.mrf.mxu0
      %v653 = vadd.f32 0.0, %v652
      %v654 = vpop.f32.mrf.mxu0
      %v655 = vpop.f32.mrf.mxu0
      %v656 = vadd.f32 0.0, %v655
      %v657 = vpop.f32.mrf.mxu0
      %658 = vmatprep.mubr.bf16.mxu0 %v542
      %659 = vmatmul.mubr.bf16.gmra.mxu0 %v429
      %v660 = vpop.f32.mrf.mxu0
      %v661 = vadd.f32 0.0, %v660
      %v662 = vpop.f32.mrf.mxu0
      %v663 = vpop.f32.mrf.mxu0
      %v664 = vadd.f32 0.0, %v663
      %v665 = vpop.f32.mrf.mxu0
      %666 = vmatprep.mubr.bf16.mxu0 %v545
      %667 = vmatmul.mubr.bf16.gmra.mxu0 %v431
      %v668 = vpop.f32.mrf.mxu0
      %v669 = vadd.f32 0.0, %v668
      %v670 = vpop.f32.mrf.mxu0
      %v671 = vpop.f32.mrf.mxu0
      %v672 = vadd.f32 0.0, %v671
      %v673 = vpop.f32.mrf.mxu0
      %674 = vmatprep.mubr.bf16.mxu0 %v548
      %675 = vmatmul.mubr.bf16.gmra.mxu0 %v433
      %v676 = vpop.f32.mrf.mxu0
      %v677 = vadd.f32 0.0, %v676
      %v678 = vpop.f32.mrf.mxu0
      %v679 = vpop.f32.mrf.mxu0
      %v680 = vadd.f32 0.0, %v679
      %v681 = vpop.f32.mrf.mxu0
      %682 = vmatprep.mubr.bf16.mxu0 %v551
      %683 = vmatmul.mubr.bf16.gmra.mxu0 %v435
      %v684 = vpop.f32.mrf.mxu0
      %v685 = vadd.f32 0.0, %v684
      %v686 = vpop.f32.mrf.mxu0
      %v687 = vpop.f32.mrf.mxu0
      %v688 = vadd.f32 0.0, %v687
      %v689 = vpop.f32.mrf.mxu0
      %690 = vmatprep.mubr.bf16.mxu0 %v554
      %691 = vmatmul.mubr.bf16.gmra.mxu0 %v437
      %v692 = vpop.f32.mrf.mxu0
      %v693 = vadd.f32 0.0, %v692
      %v694 = vpop.f32.mrf.mxu0
      %v695 = vpop.f32.mrf.mxu0
      %v696 = vadd.f32 0.0, %v695
      %v697 = vpop.f32.mrf.mxu0
      %698 = vmatprep.mubr.bf16.mxu0 %v557
      %699 = vmatmul.mubr.bf16.gmra.mxu0 %v439
      %v700 = vpop.f32.mrf.mxu0
      %v701 = vadd.f32 0.0, %v700
      %v702 = vpop.f32.mrf.mxu0
      %v703 = vpop.f32.mrf.mxu0
      %v704 = vadd.f32 0.0, %v703
      %v705 = vpop.f32.mrf.mxu0
      %706 = vmatprep.mubr.bf16.mxu0 %v560
      %707 = vmatmul.mubr.bf16.gmra.mxu0 %v441
      %v708 = vpop.f32.mrf.mxu0
      %v709 = vadd.f32 0.0, %v708
      %v710 = vpop.f32.mrf.mxu0
      %v711 = vpop.f32.mrf.mxu0
      %v712 = vadd.f32 0.0, %v711
      %v713 = vpop.f32.mrf.mxu0
      %714 = vmatprep.mubr.bf16.mxu0 %v563
      %715 = vmatmul.mubr.bf16.gmra.mxu0 %v443
      %v716 = vpop.f32.mrf.mxu0
      %v717 = vadd.f32 0.0, %v716
      %v718 = vpop.f32.mrf.mxu0
      %v719 = vpop.f32.mrf.mxu0
      %v720 = vadd.f32 0.0, %v719
      %v721 = vpop.f32.mrf.mxu0
      %722 = vmatprep.mubr.bf16.mxu0 %v566
      %723 = vmatmul.mubr.bf16.gmra.mxu0 %v445
      %v724 = vpop.f32.mrf.mxu0
      %v725 = vadd.f32 0.0, %v724
      %v726 = vpop.f32.mrf.mxu0
      %v727 = vpop.f32.mrf.mxu0
      %v728 = vadd.f32 0.0, %v727
      %v729 = vpop.f32.mrf.mxu0
      %730 = vmatprep.mubr.bf16.mxu0 %v569
      %731 = vmatmul.mubr.bf16.gmra.mxu0 %v447
      %v732 = vpop.f32.mrf.mxu0
      %v733 = vadd.f32 0.0, %v732
      %v734 = vpop.f32.mrf.mxu0
      %v735 = vpop.f32.mrf.mxu0
      %v736 = vadd.f32 0.0, %v735
      %v737 = vpop.f32.mrf.mxu0
      %738 = vdwg.mxu0
      %v739 = vld [vmem:[%s256] sm:$0x1]
      %v741 = vlaneseq
      %v742 = vshrl.u32 %v741, 7
      %v743 = vsub.s32 0, %v742
      %v744 = vrot.slane %v739, %v743
      %v746 = vmul.f32 %v613, %v744
      %v747 = vmul.f32 %v616, %v744
      %v748 = vmul.f32 %v621, %v744
      %v749 = vmul.f32 %v624, %v744
      %v750 = vmul.f32 %v629, %v744
      %v751 = vmul.f32 %v632, %v744
      %v752 = vmul.f32 %v637, %v744
      %v753 = vmul.f32 %v640, %v744
      %v754 = vmul.f32 %v645, %v744
      %v755 = vmul.f32 %v648, %v744
      %v756 = vmul.f32 %v653, %v744
      %v757 = vmul.f32 %v656, %v744
      %v758 = vmul.f32 %v661, %v744
      %v759 = vmul.f32 %v664, %v744
      %v760 = vmul.f32 %v669, %v744
      %v761 = vmul.f32 %v672, %v744
      %v762 = vmul.f32 %v677, %v744
      %v763 = vmul.f32 %v680, %v744
      %v764 = vmul.f32 %v685, %v744
      %v765 = vmul.f32 %v688, %v744
      %v766 = vmul.f32 %v693, %v744
      %v767 = vmul.f32 %v696, %v744
      %v768 = vmul.f32 %v701, %v744
      %v769 = vmul.f32 %v704, %v744
      %v770 = vmul.f32 %v709, %v744
      %v771 = vmul.f32 %v712, %v744
      %v772 = vmul.f32 %v717, %v744
      %v773 = vmul.f32 %v720, %v744
      %v774 = vmul.f32 %v725, %v744
      %v775 = vmul.f32 %v728, %v744
      %v776 = vmul.f32 %v733, %v744
      %v777 = vmul.f32 %v736, %v744
      %v778 = vld [vmem:[%s259] sm:$0x1]
      %v780 = vlaneseq
      %v781 = vshrl.u32 %v780, 7
      %v782 = vsub.s32 0, %v781
      %v783 = vrot.slane %v778, %v782
      %v785 = vadd.f32 %v746, %v783
      %v786 = vadd.f32 %v747, %v783
      %v787 = vadd.f32 %v748, %v783
      %v788 = vadd.f32 %v749, %v783
      %v789 = vadd.f32 %v750, %v783
      %v790 = vadd.f32 %v751, %v783
      %v791 = vadd.f32 %v752, %v783
      %v792 = vadd.f32 %v753, %v783
      %v793 = vadd.f32 %v754, %v783
      %v794 = vadd.f32 %v755, %v783
      %v795 = vadd.f32 %v756, %v783
      %v796 = vadd.f32 %v757, %v783
      %v797 = vadd.f32 %v758, %v783
      %v798 = vadd.f32 %v759, %v783
      %v799 = vadd.f32 %v760, %v783
      %v800 = vadd.f32 %v761, %v783
      %v801 = vadd.f32 %v762, %v783
      %v802 = vadd.f32 %v763, %v783
      %v803 = vadd.f32 %v764, %v783
      %v804 = vadd.f32 %v765, %v783
      %v805 = vadd.f32 %v766, %v783
      %v806 = vadd.f32 %v767, %v783
      %v807 = vadd.f32 %v768, %v783
      %v808 = vadd.f32 %v769, %v783
      %v809 = vadd.f32 %v770, %v783
      %v810 = vadd.f32 %v771, %v783
      %v811 = vadd.f32 %v772, %v783
      %v812 = vadd.f32 %v773, %v783
      %v813 = vadd.f32 %v774, %v783
      %v814 = vadd.f32 %v775, %v783
      %v815 = vadd.f32 %v776, %v783
      %v816 = vadd.f32 %v777, %v783
      %v817 = vmax.f32 %v785, 0.0
      %v818 = vmax.f32 %v786, 0.0
      %v819 = vmax.f32 %v787, 0.0
      %v820 = vmax.f32 %v788, 0.0
      %v821 = vmax.f32 %v789, 0.0
      %v822 = vmax.f32 %v790, 0.0
      %v823 = vmax.f32 %v791, 0.0
      %v824 = vmax.f32 %v792, 0.0
      %v825 = vmax.f32 %v793, 0.0
      %v826 = vmax.f32 %v794, 0.0
      %v827 = vmax.f32 %v795, 0.0
      %v828 = vmax.f32 %v796, 0.0
      %v829 = vmax.f32 %v797, 0.0
      %v830 = vmax.f32 %v798, 0.0
      %v831 = vmax.f32 %v799, 0.0
      %v832 = vmax.f32 %v800, 0.0
      %v833 = vmax.f32 %v801, 0.0
      %v834 = vmax.f32 %v802, 0.0
      %v835 = vmax.f32 %v803, 0.0
      %v836 = vmax.f32 %v804, 0.0
      %v837 = vmax.f32 %v805, 0.0
      %v838 = vmax.f32 %v806, 0.0
      %v839 = vmax.f32 %v807, 0.0
      %v840 = vmax.f32 %v808, 0.0
      %v841 = vmax.f32 %v809, 0.0
      %v842 = vmax.f32 %v810, 0.0
      %v843 = vmax.f32 %v811, 0.0
      %v844 = vmax.f32 %v812, 0.0
      %v845 = vmax.f32 %v813, 0.0
      %v846 = vmax.f32 %v814, 0.0
      %v847 = vmax.f32 %v815, 0.0
      %v848 = vmax.f32 %v816, 0.0
      %v849 = vpack.c.bf16 %v818, %v817
      %v850 = vpack.c.bf16 %v820, %v819
      %v851 = vpack.c.bf16 %v822, %v821
      %v852 = vpack.c.bf16 %v824, %v823
      %v853 = vpack.c.bf16 %v826, %v825
      %v854 = vpack.c.bf16 %v828, %v827
      %v855 = vpack.c.bf16 %v830, %v829
      %v856 = vpack.c.bf16 %v832, %v831
      %v857 = vpack.c.bf16 %v834, %v833
      %v858 = vpack.c.bf16 %v836, %v835
      %v859 = vpack.c.bf16 %v838, %v837
      %v860 = vpack.c.bf16 %v840, %v839
      %v861 = vpack.c.bf16 %v842, %v841
      %v862 = vpack.c.bf16 %v844, %v843
      %v863 = vpack.c.bf16 %v846, %v845
      %v864 = vpack.c.bf16 %v848, %v847
      %v881 = vunpack.c.l.b16 %v849
      %v882 = vunpack.c.h.b16 %v849
      %v883 = vunpack.c.l.b16 %v850
      %v884 = vunpack.c.h.b16 %v850
      %v885 = vunpack.c.l.b16 %v851
      %v886 = vunpack.c.h.b16 %v851
      %v887 = vunpack.c.l.b16 %v852
      %v888 = vunpack.c.h.b16 %v852
      %v889 = vunpack.c.l.b16 %v853
      %v890 = vunpack.c.h.b16 %v853
      %v891 = vunpack.c.l.b16 %v854
      %v892 = vunpack.c.h.b16 %v854
      %v893 = vunpack.c.l.b16 %v855
      %v894 = vunpack.c.h.b16 %v855
      %v895 = vunpack.c.l.b16 %v856
      %v896 = vunpack.c.h.b16 %v856
      %v897 = vunpack.c.l.b16 %v857
      %v898 = vunpack.c.h.b16 %v857
      %v899 = vunpack.c.l.b16 %v858
      %v900 = vunpack.c.h.b16 %v858
      %v901 = vunpack.c.l.b16 %v859
      %v902 = vunpack.c.h.b16 %v859
      %v903 = vunpack.c.l.b16 %v860
      %v904 = vunpack.c.h.b16 %v860
      %v905 = vunpack.c.l.b16 %v861
      %v906 = vunpack.c.h.b16 %v861
      %v907 = vunpack.c.l.b16 %v862
      %v908 = vunpack.c.h.b16 %v862
      %v909 = vunpack.c.l.b16 %v863
      %v910 = vunpack.c.h.b16 %v863
      %v911 = vunpack.c.l.b16 %v864
      %v912 = vunpack.c.h.b16 %v864
      %v913 = vpack.c.b16 %v881, %v881
      %v914 = vpack.c.b16 %v882, %v882
      %v915 = vpack.c.b16 %v883, %v883
      %v916 = vpack.c.b16 %v884, %v884
      %v917 = vpack.c.b16 %v885, %v885
      %v918 = vpack.c.b16 %v886, %v886
      %v919 = vpack.c.b16 %v887, %v887
      %v920 = vpack.c.b16 %v888, %v888
      %v921 = vpack.c.b16 %v889, %v889
      %v922 = vpack.c.b16 %v890, %v890
      %v923 = vpack.c.b16 %v891, %v891
      %v924 = vpack.c.b16 %v892, %v892
      %v925 = vpack.c.b16 %v893, %v893
      %v926 = vpack.c.b16 %v894, %v894
      %v927 = vpack.c.b16 %v895, %v895
      %v928 = vpack.c.b16 %v896, %v896
      %v929 = vpack.c.b16 %v897, %v897
      %v930 = vpack.c.b16 %v898, %v898
      %v931 = vpack.c.b16 %v899, %v899
      %v932 = vpack.c.b16 %v900, %v900
      %v933 = vpack.c.b16 %v901, %v901
      %v934 = vpack.c.b16 %v902, %v902
      %v935 = vpack.c.b16 %v903, %v903
      %v936 = vpack.c.b16 %v904, %v904
      %v937 = vpack.c.b16 %v905, %v905
      %v938 = vpack.c.b16 %v906, %v906
      %v939 = vpack.c.b16 %v907, %v907
      %v940 = vpack.c.b16 %v908, %v908
      %v941 = vpack.c.b16 %v909, %v909
      %v942 = vpack.c.b16 %v910, %v910
      %v943 = vpack.c.b16 %v911, %v911
      %v944 = vpack.c.b16 %v912, %v912
      %vm977 = vcmask 519168
      %978 = vst.msk [vmem:[%s267] sm:$0xf] %vm977, %v913
      %979 = vst.msk [vmem:[%s267 + $0x4] sm:$0xf] %vm977, %v914
      %980 = vst.msk [vmem:[%s267 + $0x8] sm:$0xf] %vm977, %v915
      %981 = vst.msk [vmem:[%s267 + $0xc] sm:$0xf] %vm977, %v916
      %982 = vst.msk [vmem:[%s267 + $0x10] sm:$0xf] %vm977, %v917
      %983 = vst.msk [vmem:[%s267 + $0x14] sm:$0xf] %vm977, %v918
      %984 = vst.msk [vmem:[%s267 + $0x18] sm:$0xf] %vm977, %v919
      %985 = vst.msk [vmem:[%s267 + $0x1c] sm:$0xf] %vm977, %v920
      %986 = vst.msk [vmem:[%s267 + $0x20] sm:$0xf] %vm977, %v921
      %987 = vst.msk [vmem:[%s267 + $0x24] sm:$0xf] %vm977, %v922
      %988 = vst.msk [vmem:[%s267 + $0x28] sm:$0xf] %vm977, %v923
      %989 = vst.msk [vmem:[%s267 + $0x2c] sm:$0xf] %vm977, %v924
      %990 = vst.msk [vmem:[%s267 + $0x30] sm:$0xf] %vm977, %v925
      %991 = vst.msk [vmem:[%s267 + $0x34] sm:$0xf] %vm977, %v926
      %992 = vst.msk [vmem:[%s267 + $0x38] sm:$0xf] %vm977, %v927
      %993 = vst.msk [vmem:[%s267 + $0x3c] sm:$0xf] %vm977, %v928
      %994 = vst.msk [vmem:[%s267 + $0x40] sm:$0xf] %vm977, %v929
      %995 = vst.msk [vmem:[%s267 + $0x44] sm:$0xf] %vm977, %v930
      %996 = vst.msk [vmem:[%s267 + $0x48] sm:$0xf] %vm977, %v931
      %997 = vst.msk [vmem:[%s267 + $0x4c] sm:$0xf] %vm977, %v932
      %998 = vst.msk [vmem:[%s267 + $0x50] sm:$0xf] %vm977, %v933
      %999 = vst.msk [vmem:[%s267 + $0x54] sm:$0xf] %vm977, %v934
      %1000 = vst.msk [vmem:[%s267 + $0x58] sm:$0xf] %vm977, %v935
      %1001 = vst.msk [vmem:[%s267 + $0x5c] sm:$0xf] %vm977, %v936
      %1002 = vst.msk [vmem:[%s267 + $0x60] sm:$0xf] %vm977, %v937
      %1003 = vst.msk [vmem:[%s267 + $0x64] sm:$0xf] %vm977, %v938
      %1004 = vst.msk [vmem:[%s267 + $0x68] sm:$0xf] %vm977, %v939
      %1005 = vst.msk [vmem:[%s267 + $0x6c] sm:$0xf] %vm977, %v940
      %1006 = vst.msk [vmem:[%s267 + $0x70] sm:$0xf] %vm977, %v941
      %1007 = vst.msk [vmem:[%s267 + $0x74] sm:$0xf] %vm977, %v942
      %1008 = vst.msk [vmem:[%s267 + $0x78] sm:$0xf] %vm977, %v943
      %1009 = vst.msk [vmem:[%s267 + $0x7c] sm:$0xf] %vm977, %v944
      %s1010 = smul.u32 32, %s19
      %p1011 = scmp.lt.s32.totalorder %s1010, 63
      %s1012 = scalar_select %p1011, %s1010, 63
      %p1013 = scmp.lt.s32.totalorder %s20, 0
      %s1014 = scalar_select %p1013, %s20, 0
      %s1015 = sadd.s32 %s1014, %s1012
      %s1016 = smul.addr %s1015, 4
      %s1017 = scalar_lea.vmem %s4, %s1016
      // Predicated region
      $region37: #{tpu_custom_call.1} parent=35 // pred_check
        %p1018 = pneg %p151
      $region38: #{tpu_custom_call.1} parent=35 // pred_check_branch
        %1020 = sbr.rel (%p1018) target = $region40
      $region39: #{tpu_custom_call.1} parent=35 // pred_region
        %s1021 = smul.u32 32, %s19
      $region40: #{tpu_custom_call.1} parent=35 // pred_fallthru
        _
    $region36: #{tpu_custom_call.1} parent=5 // pred_fallthru
      _
    %p1022 = scmp.le.s32.totalorder 2, %s10
    // Predicated region
    $region41: #{tpu_custom_call.1} parent=5 // pred_check
      %p1023 = pneg %p1022
    $region42: #{tpu_custom_call.1} parent=5 // pred_check_branch
      %1025 = sbr.rel (%p1023) target = $region44
    $region43: #{tpu_custom_call.1} parent=5 // pred_region
      %s1026 = ssub.s32 %s10, 2
      // Predicated region
      $region45: #{tpu_custom_call.1} parent=43 // pred_check
        %p1027 = pneg %p157
      $region46: #{tpu_custom_call.1} parent=43 // pred_check_branch
        %1029 = sbr.rel (%p1027) target = $region48
      $region47: #{tpu_custom_call.1} parent=43 // pred_region
        %s1030 = smul.u32 32, %s21
        %p1031 = scmp.lt.s32.totalorder %s1030, 63
        %s1032 = scalar_select %p1031, %s1030, 63
        %p1033 = scmp.lt.s32.totalorder %s22, 0
        %s1034 = scalar_select %p1033, %s22, 0
        %s1035 = sadd.s32 %s1034, %s1032
        %s1036 = smul.addr %s1035, 4
        %s1037 = scalar_lea.vmem %s4, %s1036
      $region48: #{tpu_custom_call.1} parent=43 // pred_fallthru
        _
    $region44: #{tpu_custom_call.1} parent=5 // pred_fallthru
      _
  $region6: #{tpu_custom_call.1} parent=0 // loop_footer
    %s14 = sadd.s32 1, %s10
  $region7: #{tpu_custom_call.1} parent=0 // loop_footer_branch
    %9 = sbr.rel target = $region3
  $region8: #{tpu_custom_call.1} parent=0 // loop_exit
    _

</llo_original>
